<compile_context>
chip_gen: v6e
topology: v6e:2x2x1
jax: 0.10.0
libtpu: 0.0.40
codegen_flags: <defaults>
</compile_context>

<pallas_src>
import functools

import jax
import jax.numpy as jnp
from jax.experimental import pallas as pl
from jax.experimental.pallas import tpu as pltpu


_DEFAULT_BLOCK_BUDGET = 24 * 1024 * 1024   # double-buffered per-step block footprint target
_VMEM_LIMIT_BYTES = 40 * 1024 * 1024       # < v7x's 64 MiB physical; plenty on v5e/v6e


def _round_up(x, m):
    return (x + m - 1) // m * m


def _sublane_tile(dtype):
    # rows per native sublane tile: 8 (f32), 16 (bf16/f16), 32 (int8/fp8)
    return 8 * max(1, 4 // jnp.dtype(dtype).itemsize)


# ---------------------------------------------------------------------------
# Kernels
# ---------------------------------------------------------------------------

def _bmm_kernel_packed(x_ref, w_ref, o_ref, *, bh, k_pad, n_pad):
    # Fast path: full K per step, `bh` heads packed per step.
    #   x block: (tS, bh*K_pad) slice of the fused (S, B*K_pad) view
    #   w block: (bh, K_pad, N_pad) — resident across S tiles
    #   o block: (tS, bh*N_pad) slice of the fused (S, B*N_pad) view
    for h in range(bh):
        xh = x_ref[:, h * k_pad:(h + 1) * k_pad]
        o_ref[:, h * n_pad:(h + 1) * n_pad] = jnp.dot(
            xh, w_ref[h], preferred_element_type=jnp.float32
        ).astype(o_ref.dtype)


def _bmm_kernel_acc(x_ref, w_ref, o_ref, acc_ref):
    # Fallback: K-tiled reduction with an fp32 VMEM accumulator (rare: huge K/N).
    @pl.when(pl.program_id(3) == 0)
    def _init():
        acc_ref[...] = jnp.zeros_like(acc_ref)

    acc_ref[...] += jnp.dot(
        x_ref[...], w_ref[0], preferred_element_type=jnp.float32
    )

    @pl.when(pl.program_id(3) == pl.num_programs(3) - 1)
    def _store():
        o_ref[...] = acc_ref[...].astype(o_ref.dtype)


# ---------------------------------------------------------------------------
# Wrapper
# ---------------------------------------------------------------------------

def deepseek_v2_bmm(x, weight, *, block_budget_bytes=_DEFAULT_BLOCK_BUDGET):
    """DeepseekV2BMM.forward.

    x:      (S, B, K)  — token-major activations (torch input layout)
    weight: (B, K, N)  — per-head projection
    returns (S, B, N)  with out[s, b] = x[s, b] @ weight[b]
    """
    S, B, K = x.shape
    Bw, Kw, N = weight.shape
    assert (Bw, Kw) == (B, K), (x.shape, weight.shape)
    out_dtype = x.dtype
    x_isz = jnp.dtype(x.dtype).itemsize
    w_isz = jnp.dtype(weight.dtype).itemsize
    o_isz = jnp.dtype(out_dtype).itemsize

    K_pad = _round_up(K, 128)
    N_pad = _round_up(N, 128)
    sub = _sublane_tile(out_dtype)

    # Zero-pad K (it feeds the reduction) and N (weight only). S is never padded:
    # ragged last S tiles are handled by Pallas' masked writeback.
    if K_pad != K:
        x = jnp.pad(x, ((0, 0), (0, 0), (0, K_pad - K)))
    if (K_pad, N_pad) != (K, N):
        weight = jnp.pad(weight, ((0, 0), (0, K_pad - K), (0, N_pad - N)))

    # Layout-preserving (free) reshape: fuse (B, K) onto the lane axis so the per-head
    # gather ("x.transpose(0,1)") happens in the index_map / DMA, never materialized.
    x_fused = x.reshape(S, B * K_pad)

    cost = pl.CostEstimate(
        flops=2 * S * B * K * N,
        transcendentals=0,
        bytes_accessed=(S * B * K) * x_isz + (B * K * N) * w_isz + (S * B * N) * o_isz,
    )

    def fast_footprint(ts, bh):
        xb = ts * bh * K_pad * x_isz
        wb = bh * K_pad * N_pad * w_isz
        ob = ts * bh * N_pad * o_isz
        return 2 * (xb + wb + ob)          # double-buffered

    # ---- fast path tile selection: kb == 1, tN == N_pad, Bh heads packed per step ----
    tS = min(1024, _round_up(S, sub))
    while tS > sub and fast_footprint(tS, 1) > block_budget_bytes:
        tS = max(sub, (tS // 2) // sub * sub)

    if fast_footprint(tS, 1) <= block_budget_bytes:
        bh = max(d for d in range(1, B + 1)
                 if B % d == 0 and fast_footprint(tS, d) <= block_budget_bytes)
        gb = B // bh
        sb = pl.cdiv(S, tS)

        kernel = functools.partial(_bmm_kernel_packed, bh=bh, k_pad=K_pad, n_pad=N_pad)

        if gb == 1:
            # Single head group: 1-D grid so the (parallel, splittable) axis is S tiles.
            grid = (sb,)
            in_specs = [
                pl.BlockSpec((tS, bh * K_pad), lambda s: (s, 0)),
                pl.BlockSpec((bh, K_pad, N_pad), lambda s: (0, 0, 0)),
            ]
            out_spec = pl.BlockSpec((tS, bh * N_pad), lambda s: (s, 0))
            semantics = ("parallel",)
        else:
            # s innermost: the head group's weight block stays VMEM-resident across S tiles.
            grid = (gb, sb)
            in_specs = [
                pl.BlockSpec((tS, bh * K_pad), lambda g, s: (s, g)),
                pl.BlockSpec((bh, K_pad, N_pad), lambda g, s: (g, 0, 0)),
            ]
            out_spec = pl.BlockSpec((tS, bh * N_pad), lambda g, s: (s, g))
            semantics = ("parallel", "parallel")

        out_fused = pl.pallas_call(
            kernel,
            grid=grid,
            in_specs=in_specs,
            out_specs=out_spec,
            out_shape=jax.ShapeDtypeStruct((S, B * N_pad), out_dtype),
            compiler_params=pltpu.CompilerParams(
                dimension_semantics=semantics,
                vmem_limit_bytes=_VMEM_LIMIT_BYTES,
            ),
            cost_estimate=cost,
        )(x_fused, weight)
    else:
        # ---- fallback: K/N-tiled with fp32 accumulator (huge K/N only) ----
        tS = min(512, _round_up(S, sub))

        def fb_footprint(ts, tk, tn):
            return (2 * (ts * tk * x_isz + tk * tn * w_isz + ts * tn * o_isz)
                    + ts * tn * 4)

        def tile_cands(dim):
            c = [t for t in (2048, 1024, 512, 256, 128) if dim % t == 0]
            return c or [dim]

        tK, tN = tile_cands(K_pad)[-1], tile_cands(N_pad)[-1]
        for cK in tile_cands(K_pad):
            found = False
            for cN in tile_cands(N_pad):
                if fb_footprint(tS, cK, cN) <= block_budget_bytes:
                    tK, tN, found = cK, cN, True
                    break
            if found:
                break

        kb = K_pad // tK
        nb = N_pad // tN
        sb = pl.cdiv(S, tS)
        grid = (B, nb, sb, kb)   # reduction axis innermost

        in_specs = [
            pl.BlockSpec((tS, tK), lambda b, n, s, k: (s, b * kb + k)),
            pl.BlockSpec((1, tK, tN), lambda b, n, s, k: (b, k, n)),
        ]
        out_spec = pl.BlockSpec((tS, tN), lambda b, n, s, k: (s, b * nb + n))

        out_fused = pl.pallas_call(
            _bmm_kernel_acc,
            grid=grid,
            in_specs=in_specs,
            out_specs=out_spec,
            out_shape=jax.ShapeDtypeStruct((S, B * N_pad), out_dtype),
            scratch_shapes=[pltpu.VMEM((tS, tN), jnp.float32)],
            compiler_params=pltpu.CompilerParams(
                dimension_semantics=("parallel", "parallel", "parallel", "arbitrary"),
                vmem_limit_bytes=_VMEM_LIMIT_BYTES,
            ),
            cost_estimate=cost,
        )(x_fused, weight)

    out = out_fused.reshape(S, B, N_pad)   # free split of the minor dim
    if N_pad != N:
        out = out[:, :, :N]
    return out


# ---------------------------------------------------------------------------
# main
# ---------------------------------------------------------------------------

def _check(x, w, budget=None, atol=2e-2, rtol=2e-2):
    if budget is None:
        fn = deepseek_v2_bmm
    else:
        fn = functools.partial(deepseek_v2_bmm, block_budget_bytes=budget)
    out = jax.block_until_ready(jax.jit(fn)(x, w))
    ref = jnp.einsum(
        "sbk,bkn->sbn", x.astype(jnp.float32), w.astype(jnp.float32)
    )
    assert out.shape == ref.shape, (out.shape, ref.shape)
    assert bool(jnp.all(jnp.isfinite(out)))
    assert bool(
        jnp.allclose(out.astype(jnp.float32), ref, atol=atol, rtol=rtol)
    ), float(jnp.max(jnp.abs(out.astype(jnp.float32) - ref)))
    return out


if __name__ == "__main__":
    key = jax.random.PRNGKey(0)
    k1, k2, k3, k4, k5, k6 = jax.random.split(key, 6)

    # Case 1: MLA-style aligned shapes, bf16, all heads packed into one group (gb == 1),
    #         ragged S handled without padding.
    heads, seq, in_f, out_f = 4, 8, 128, 256
    x1 = jax.random.normal(k1, (seq, heads, in_f), jnp.float32).astype(jnp.bfloat16)
    w1 = (0.05 * jax.random.normal(k2, (heads, in_f, out_f), jnp.float32)).astype(jnp.bfloat16)
    _check(x1, w1)

    # Case 2: fast path with multiple head groups (budget caps packing at 2 heads/step).
    heads, seq, in_f, out_f = 4, 32, 128, 256
    x2 = jax.random.normal(k3, (seq, heads, in_f), jnp.float32).astype(jnp.bfloat16)
    w2 = (0.05 * jax.random.normal(k4, (heads, in_f, out_f), jnp.float32)).astype(jnp.bfloat16)
    _check(x2, w2, budget=512 * 1024)

    # Case 3: misaligned S/K/N — exercises K/N zero-padding, ragged S, and (via a tiny
    #         budget) the K-tiled fp32-accumulator fallback path.
    heads, seq, in_f, out_f = 2, 9, 320, 96
    x3 = jax.random.normal(k5, (seq, heads, in_f), jnp.float32).astype(jnp.bfloat16)
    w3 = (0.05 * jax.random.normal(k6, (heads, in_f, out_f), jnp.float32)).astype(jnp.bfloat16)
    _check(x3, w3, budget=192 * 1024)

    print("KERNEL_OK")
</pallas_src>

<mosaic_0001>
module attributes {stable_mosaic.version = 11 : i64} {
  func.func @_bmm_kernel_packed(%arg0: i32, %arg1: memref<16x512xbf16, #tpu.memory_space<vmem>>, %arg2: memref<4x128x256xbf16, #tpu.memory_space<vmem>>, %arg3: memref<16x1024xbf16, #tpu.memory_space<vmem>>) attributes {dimension_semantics = [#tpu.dimension_semantics<parallel>], iteration_bounds = array<i64: 1>, scalar_prefetch = 0 : i64, scratch_operands = 0 : i64, tpu.core_type = #tpu.core_type<tc>, window_params = [{transform_indices = @transform_0, window_bounds = array<i64: 16, 512>}, {pipeline_mode = #tpu.pipeline_mode<synchronous>, transform_indices = @transform_1, window_bounds = array<i64: 4, 128, 256>}, {transform_indices = @transform_2, window_bounds = array<i64: 16, 1024>}]} {
    %c0 = arith.constant 0 : index
    %c0_0 = arith.constant 0 : index
    %0 = vector.load %arg1[%c0, %c0_0] : memref<16x512xbf16, #tpu.memory_space<vmem>>, vector<16x128xbf16>
    %c0_1 = arith.constant 0 : index
    %c0_2 = arith.constant 0 : index
    %c0_3 = arith.constant 0 : index
    %1 = vector.load %arg2[%c0_1, %c0_2, %c0_3] : memref<4x128x256xbf16, #tpu.memory_space<vmem>>, vector<1x128x256xbf16>
    %2 = vector.shape_cast %1 : vector<1x128x256xbf16> to vector<128x256xbf16>
    %cst = arith.constant dense<0.000000e+00> : vector<16x256xf32>
    %3 = tpu.matmul %0, %2, %cst {dimension_numbers = #tpu.dot_dimension_numbers<[1], [0], [0], [1], [0, 0, 1, 1], [], []>} : vector<16x128xbf16>, vector<128x256xbf16>, vector<16x256xf32> -> vector<16x256xf32>
    %4 = arith.truncf %3 : vector<16x256xf32> to vector<16x256xbf16>
    %c0_4 = arith.constant 0 : index
    %c0_5 = arith.constant 0 : index
    %5 = vector.load %arg3[%c0_4, %c0_5] : memref<16x1024xbf16, #tpu.memory_space<vmem>>, vector<16x256xbf16>
    tpu.vector_store %arg3[%c0_4, %c0_5], %4 {strides = array<i32>} : memref<16x1024xbf16, #tpu.memory_space<vmem>>, vector<16x256xbf16>,
    %c0_6 = arith.constant 0 : index
    %c128 = arith.constant 128 : index
    %6 = vector.load %arg1[%c0_6, %c128] : memref<16x512xbf16, #tpu.memory_space<vmem>>, vector<16x128xbf16>
    %c1 = arith.constant 1 : index
    %c0_7 = arith.constant 0 : index
    %c0_8 = arith.constant 0 : index
    %7 = vector.load %arg2[%c1, %c0_7, %c0_8] : memref<4x128x256xbf16, #tpu.memory_space<vmem>>, vector<1x128x256xbf16>
    %8 = vector.shape_cast %7 : vector<1x128x256xbf16> to vector<128x256xbf16>
    %cst_9 = arith.constant dense<0.000000e+00> : vector<16x256xf32>
    %9 = tpu.matmul %6, %8, %cst_9 {dimension_numbers = #tpu.dot_dimension_numbers<[1], [0], [0], [1], [0, 0, 1, 1], [], []>} : vector<16x128xbf16>, vector<128x256xbf16>, vector<16x256xf32> -> vector<16x256xf32>
    %10 = arith.truncf %9 : vector<16x256xf32> to vector<16x256xbf16>
    %c0_10 = arith.constant 0 : index
    %c256 = arith.constant 256 : index
    %11 = vector.load %arg3[%c0_10, %c256] : memref<16x1024xbf16, #tpu.memory_space<vmem>>, vector<16x256xbf16>
    tpu.vector_store %arg3[%c0_10, %c256], %10 {strides = array<i32>} : memref<16x1024xbf16, #tpu.memory_space<vmem>>, vector<16x256xbf16>,
    %c0_11 = arith.constant 0 : index
    %c256_12 = arith.constant 256 : index
    %12 = vector.load %arg1[%c0_11, %c256_12] : memref<16x512xbf16, #tpu.memory_space<vmem>>, vector<16x128xbf16>
    %c2 = arith.constant 2 : index
    %c0_13 = arith.constant 0 : index
    %c0_14 = arith.constant 0 : index
    %13 = vector.load %arg2[%c2, %c0_13, %c0_14] : memref<4x128x256xbf16, #tpu.memory_space<vmem>>, vector<1x128x256xbf16>
    %14 = vector.shape_cast %13 : vector<1x128x256xbf16> to vector<128x256xbf16>
    %cst_15 = arith.constant dense<0.000000e+00> : vector<16x256xf32>
    %15 = tpu.matmul %12, %14, %cst_15 {dimension_numbers = #tpu.dot_dimension_numbers<[1], [0], [0], [1], [0, 0, 1, 1], [], []>} : vector<16x128xbf16>, vector<128x256xbf16>, vector<16x256xf32> -> vector<16x256xf32>
    %16 = arith.truncf %15 : vector<16x256xf32> to vector<16x256xbf16>
    %c0_16 = arith.constant 0 : index
    %c512 = arith.constant 512 : index
    %17 = vector.load %arg3[%c0_16, %c512] : memref<16x1024xbf16, #tpu.memory_space<vmem>>, vector<16x256xbf16>
    tpu.vector_store %arg3[%c0_16, %c512], %16 {strides = array<i32>} : memref<16x1024xbf16, #tpu.memory_space<vmem>>, vector<16x256xbf16>,
    %c0_17 = arith.constant 0 : index
    %c384 = arith.constant 384 : index
    %18 = vector.load %arg1[%c0_17, %c384] : memref<16x512xbf16, #tpu.memory_space<vmem>>, vector<16x128xbf16>
    %c3 = arith.constant 3 : index
    %c0_18 = arith.constant 0 : index
    %c0_19 = arith.constant 0 : index
    %19 = vector.load %arg2[%c3, %c0_18, %c0_19] : memref<4x128x256xbf16, #tpu.memory_space<vmem>>, vector<1x128x256xbf16>
    %20 = vector.shape_cast %19 : vector<1x128x256xbf16> to vector<128x256xbf16>
    %cst_20 = arith.constant dense<0.000000e+00> : vector<16x256xf32>
    %21 = tpu.matmul %18, %20, %cst_20 {dimension_numbers = #tpu.dot_dimension_numbers<[1], [0], [0], [1], [0, 0, 1, 1], [], []>} : vector<16x128xbf16>, vector<128x256xbf16>, vector<16x256xf32> -> vector<16x256xf32>
    %22 = arith.truncf %21 : vector<16x256xf32> to vector<16x256xbf16>
    %c0_21 = arith.constant 0 : index
    %c768 = arith.constant 768 : index
    %23 = vector.load %arg3[%c0_21, %c768] : memref<16x1024xbf16, #tpu.memory_space<vmem>>, vector<16x256xbf16>
    tpu.vector_store %arg3[%c0_21, %c768], %22 {strides = array<i32>} : memref<16x1024xbf16, #tpu.memory_space<vmem>>, vector<16x256xbf16>,
    return
  }
  func.func @transform_0(%arg0: i32) -> (i32, i32) {
    %c0_i32 = arith.constant 0 : i32
    %c0_i32_0 = arith.constant 0 : i32
    return %arg0, %c0_i32 : i32, i32
  }
  func.func @transform_1(%arg0: i32) -> (i32, i32, i32) {
    %c0_i32 = arith.constant 0 : i32
    %c0_i32_0 = arith.constant 0 : i32
    %c0_i32_1 = arith.constant 0 : i32
    %c0_i32_2 = arith.constant 0 : i32
    return %c0_i32, %c0_i32_0, %c0_i32_1 : i32, i32, i32
  }
  func.func @transform_2(%arg0: i32) -> (i32, i32) {
    %c0_i32 = arith.constant 0 : i32
    %c0_i32_0 = arith.constant 0 : i32
    return %arg0, %c0_i32 : i32, i32
  }
}

</mosaic_0001>

<llo_original>
// kernel: deepseek_v2_bmm.1
$region0: #{deepseek_v2_bmm.1}
  #allocation0 [shape = 'u32[]', space=smem, size = 0x4, offset = 0x4, fixed_abs, tag = 'smem constant byte address 0x4 - core index']
  #allocation1 [shape = 'u32[144,128]{1,0:T(1,128)}', space=vmem, size = 0x12000, scoped, tag = 'internal scratch']
  %s0 = inlined_call_operand.vmem [shape: bf16[8,512], index: 0, kind: input, shape index: {}]
  %s1 = inlined_call_operand.hbm [shape: bf16[4,128,256], index: 1, kind: input, shape index: {}]
  %s2 = inlined_call_operand.vmem [shape: bf16[8,1024], index: 2, kind: output, shape index: {}]
  %s3 = sld [smem:[#allocation0]]
  $region41: #{deepseek_v2_bmm.1} parent=0
    _
  %s5 = ssub.s32 1, %s3
  %s6 = scalar_select 0, %s5, %s3
  $region1: #{deepseek_v2_bmm.1} parent=0
    #allocation2 [shape = 'u8[262144]{0}', space=vmem, size = 0x40000, scoped, tag = 'input window, operand 1, single buffered']
    #allocation3 [shape = 's32[1]{0}', space=sflag, size = 0x4, scoped, tag = 'scoped memory for deepseek_v2_bmm.1']
    #allocation4 [shape = 'u8[32768]{0}', space=vmem, size = 0x8000, scoped, tag = 'output window, operand 0, single buffered']
    %7 = vsyncpa [#allocation3], 0
    // Predicated region
    $region2: #{deepseek_v2_bmm.1} parent=1 // pred_check
      _
    $region3: #{deepseek_v2_bmm.1} parent=1 // pred_check_branch
      %9 = sbr.rel (0) target = $region5
    $region4: #{deepseek_v2_bmm.1} parent=1 // pred_region
      _
    $region5: #{deepseek_v2_bmm.1} parent=1 // pred_fallthru
      _
    // Predicated region
    $region6: #{deepseek_v2_bmm.1} parent=1 // pred_check
      _
    $region7: #{deepseek_v2_bmm.1} parent=1 // pred_check_branch
      %11 = sbr.rel (0) target = $region9
    $region8: #{deepseek_v2_bmm.1} parent=1 // pred_region
      %s13 = ssub.s32 8192, 8192
      %14 = vsyncadd [#allocation3], %s13
      %s15 = sshll.u32 [#allocation2], 4
      %s16 = int_to_ptr.vmem [resolvable:$true] %s15
      %21 = dma.hbm_to_vmem [thread:$0]  %s1, 8192, %s16, [#allocation3], 128, 128, 8
    $region9: #{deepseek_v2_bmm.1} parent=1 // pred_fallthru
      _
    // Predicated region
    $region10: #{deepseek_v2_bmm.1} parent=1 // pred_check
      _
    $region11: #{deepseek_v2_bmm.1} parent=1 // pred_check_branch
      %23 = sbr.rel (0) target = $region13
    $region12: #{deepseek_v2_bmm.1} parent=1 // pred_region
      %24 = dma.done [#allocation3], 8192
    $region13: #{deepseek_v2_bmm.1} parent=1 // pred_fallthru
      _
    %v26 = vld [vmem:[%s0] sm:$0xf]
    %v27 = vld [vmem:[%s0 + $0x10] sm:$0xf]
    %v28 = vld [vmem:[#allocation2] sm:$0xff]
    %v29 = vld [vmem:[#allocation2 + $0x8] sm:$0xff]
    %v30 = vld [vmem:[#allocation2 + $0x10] sm:$0xff]
    %v31 = vld [vmem:[#allocation2 + $0x18] sm:$0xff]
    %v32 = vld [vmem:[#allocation2 + $0x20] sm:$0xff]
    %v33 = vld [vmem:[#allocation2 + $0x28] sm:$0xff]
    %v34 = vld [vmem:[#allocation2 + $0x30] sm:$0xff]
    %v35 = vld [vmem:[#allocation2 + $0x38] sm:$0xff]
    %v36 = vld [vmem:[#allocation2 + $0x40] sm:$0xff]
    %v37 = vld [vmem:[#allocation2 + $0x48] sm:$0xff]
    %v38 = vld [vmem:[#allocation2 + $0x50] sm:$0xff]
    %v39 = vld [vmem:[#allocation2 + $0x58] sm:$0xff]
    %v40 = vld [vmem:[#allocation2 + $0x60] sm:$0xff]
    %v41 = vld [vmem:[#allocation2 + $0x68] sm:$0xff]
    %v42 = vld [vmem:[#allocation2 + $0x70] sm:$0xff]
    %v43 = vld [vmem:[#allocation2 + $0x78] sm:$0xff]
    %v46 = vunpack.c.l.b16 %v26
    %v47 = vunpack.c.l.b16 %v27
    %v48 = vpack.c.b16 %v47, %v46
    %v66 = vunpack.c.l.b16 %v28
    %v67 = vunpack.c.h.b16 %v28
    %v68 = vunpack.c.l.b16 %v29
    %v69 = vunpack.c.h.b16 %v29
    %v70 = vunpack.c.l.b16 %v30
    %v71 = vunpack.c.h.b16 %v30
    %v72 = vunpack.c.l.b16 %v31
    %v73 = vunpack.c.h.b16 %v31
    %v74 = vunpack.c.l.b16 %v32
    %v75 = vunpack.c.h.b16 %v32
    %v76 = vunpack.c.l.b16 %v33
    %v77 = vunpack.c.h.b16 %v33
    %v78 = vunpack.c.l.b16 %v34
    %v79 = vunpack.c.h.b16 %v34
    %v80 = vunpack.c.l.b16 %v35
    %v81 = vunpack.c.h.b16 %v35
    %v82 = vunpack.c.l.b16 %v36
    %v83 = vunpack.c.h.b16 %v36
    %v84 = vunpack.c.l.b16 %v37
    %v85 = vunpack.c.h.b16 %v37
    %v86 = vunpack.c.l.b16 %v38
    %v87 = vunpack.c.h.b16 %v38
    %v88 = vunpack.c.l.b16 %v39
    %v89 = vunpack.c.h.b16 %v39
    %v90 = vunpack.c.l.b16 %v40
    %v91 = vunpack.c.h.b16 %v40
    %v92 = vunpack.c.l.b16 %v41
    %v93 = vunpack.c.h.b16 %v41
    %v94 = vunpack.c.l.b16 %v42
    %v95 = vunpack.c.h.b16 %v42
    %v96 = vunpack.c.l.b16 %v43
    %v97 = vunpack.c.h.b16 %v43
    %v98 = vpack.c.b16 %v68, %v66
    %v99 = vpack.c.b16 %v69, %v67
    %v100 = vpack.c.b16 %v72, %v70
    %v101 = vpack.c.b16 %v73, %v71
    %v102 = vpack.c.b16 %v76, %v74
    %v103 = vpack.c.b16 %v77, %v75
    %v104 = vpack.c.b16 %v80, %v78
    %v105 = vpack.c.b16 %v81, %v79
    %v106 = vpack.c.b16 %v84, %v82
    %v107 = vpack.c.b16 %v85, %v83
    %v108 = vpack.c.b16 %v88, %v86
    %v109 = vpack.c.b16 %v89, %v87
    %v110 = vpack.c.b16 %v92, %v90
    %v111 = vpack.c.b16 %v93, %v91
    %v112 = vpack.c.b16 %v96, %v94
    %v113 = vpack.c.b16 %v97, %v95
    %130 = vmatprep.subr.bf16.mxu0 %v113
    %131 = vmatpush1.bf16.msra.mxu0 %v112
    %132 = vmatprep.subr.bf16.mxu0 %v111
    %133 = vmatpush1.bf16.msra.mxu0 %v110
    %134 = vmatprep.subr.bf16.mxu0 %v109
    %135 = vmatpush1.bf16.msra.mxu0 %v108
    %136 = vmatprep.subr.bf16.mxu0 %v107
    %137 = vmatpush1.bf16.msra.mxu0 %v106
    %138 = vmatprep.subr.bf16.mxu0 %v105
    %139 = vmatpush1.bf16.msra.mxu0 %v104
    %140 = vmatprep.subr.bf16.mxu0 %v103
    %141 = vmatpush1.bf16.msra.mxu0 %v102
    %142 = vmatprep.subr.bf16.mxu0 %v101
    %143 = vmatpush1.bf16.msra.mxu0 %v100
    %144 = vmatprep.subr.bf16.mxu0 %v99
    %145 = vmatpush1.bf16.msra.mxu0 %v98
    %146 = vmatprep.subr.bf16.mxu0 0
    %147 = vmatpush2.bf16.msra.mxu0 0
    %148 = vmatprep.subr.bf16.mxu0 0
    %149 = vmatpush2.bf16.msra.mxu0 0
    %150 = vmatprep.subr.bf16.mxu0 0
    %151 = vmatpush2.bf16.msra.mxu0 0
    %152 = vmatprep.subr.bf16.mxu0 0
    %153 = vmatpush2.bf16.msra.mxu0 0
    %154 = vmatprep.subr.bf16.mxu0 0
    %155 = vmatpush2.bf16.msra.mxu0 0
    %156 = vmatprep.subr.bf16.mxu0 0
    %157 = vmatpush2.bf16.msra.mxu0 0
    %158 = vmatprep.subr.bf16.mxu0 0
    %159 = vmatpush2.bf16.msra.mxu0 0
    %160 = vmatprep.subr.bf16.mxu0 0
    %161 = vmatpush2.bf16.msra.mxu0 0
    %162 = vmatprep.mubr.bf16.mxu0 0
    %163 = vmatmul.mubr.bf16.gmra.mxu0 %v48
    %v164 = vpop.f32.mrf.mxu0
    %v165 = vadd.f32 0.0, %v164
    %v166 = vpop.f32.mrf.mxu0
    %v167 = vadd.f32 0.0, %v166
    %v168 = vpop.f32.mrf.mxu0
    %v169 = vadd.f32 0.0, %v168
    %v170 = vpop.f32.mrf.mxu0
    %v171 = vadd.f32 0.0, %v170
    %172 = vdwg.mxu0
    %v173 = vpack.c.bf16 %v169, %v165
    %v174 = vpack.c.bf16 %v171, %v167
    %v177 = vunpack.c.l.b16 %v173
    %v178 = vunpack.c.l.b16 %v174
    %v179 = vunpack.c.h.b16 %v173
    %v180 = vunpack.c.h.b16 %v174
    %v181 = vpack.c.b16 %v178, %v177
    %v182 = vpack.c.b16 %v180, %v179
    %185 = vst [vmem:[#allocation4] sm:$0xff] %v181
    %186 = vst [vmem:[#allocation4 + $0x20] sm:$0xff] %v182
    %v187 = vld [vmem:[%s0 + $0x4] sm:$0xf]
    %v188 = vld [vmem:[%s0 + $0x14] sm:$0xf]
    %s189 = scalar_lea.vmem [#allocation2], 128
    %v190 = vld [vmem:[%s189] sm:$0xff]
    %v191 = vld [vmem:[%s189 + $0x8] sm:$0xff]
    %v192 = vld [vmem:[%s189 + $0x10] sm:$0xff]
    %v193 = vld [vmem:[%s189 + $0x18] sm:$0xff]
    %v194 = vld [vmem:[%s189 + $0x20] sm:$0xff]
    %v195 = vld [vmem:[%s189 + $0x28] sm:$0xff]
    %v196 = vld [vmem:[%s189 + $0x30] sm:$0xff]
    %v197 = vld [vmem:[%s189 + $0x38] sm:$0xff]
    %v198 = vld [vmem:[%s189 + $0x40] sm:$0xff]
    %v199 = vld [vmem:[%s189 + $0x48] sm:$0xff]
    %v200 = vld [vmem:[%s189 + $0x50] sm:$0xff]
    %v201 = vld [vmem:[%s189 + $0x58] sm:$0xff]
    %v202 = vld [vmem:[%s189 + $0x60] sm:$0xff]
    %v203 = vld [vmem:[%s189 + $0x68] sm:$0xff]
    %v204 = vld [vmem:[%s189 + $0x70] sm:$0xff]
    %v205 = vld [vmem:[%s189 + $0x78] sm:$0xff]
    %v208 = vunpack.c.l.b16 %v187
    %v209 = vunpack.c.l.b16 %v188
    %v210 = vpack.c.b16 %v209, %v208
    %v228 = vunpack.c.l.b16 %v190
    %v229 = vunpack.c.h.b16 %v190
    %v230 = vunpack.c.l.b16 %v191
    %v231 = vunpack.c.h.b16 %v191
    %v232 = vunpack.c.l.b16 %v192
    %v233 = vunpack.c.h.b16 %v192
    %v234 = vunpack.c.l.b16 %v193
    %v235 = vunpack.c.h.b16 %v193
    %v236 = vunpack.c.l.b16 %v194
    %v237 = vunpack.c.h.b16 %v194
    %v238 = vunpack.c.l.b16 %v195
    %v239 = vunpack.c.h.b16 %v195
    %v240 = vunpack.c.l.b16 %v196
    %v241 = vunpack.c.h.b16 %v196
    %v242 = vunpack.c.l.b16 %v197
    %v243 = vunpack.c.h.b16 %v197
    %v244 = vunpack.c.l.b16 %v198
    %v245 = vunpack.c.h.b16 %v198
    %v246 = vunpack.c.l.b16 %v199
    %v247 = vunpack.c.h.b16 %v199
    %v248 = vunpack.c.l.b16 %v200
    %v249 = vunpack.c.h.b16 %v200
    %v250 = vunpack.c.l.b16 %v201
    %v251 = vunpack.c.h.b16 %v201
    %v252 = vunpack.c.l.b16 %v202
    %v253 = vunpack.c.h.b16 %v202
    %v254 = vunpack.c.l.b16 %v203
    %v255 = vunpack.c.h.b16 %v203
    %v256 = vunpack.c.l.b16 %v204
    %v257 = vunpack.c.h.b16 %v204
    %v258 = vunpack.c.l.b16 %v205
    %v259 = vunpack.c.h.b16 %v205
    %v260 = vpack.c.b16 %v230, %v228
    %v261 = vpack.c.b16 %v231, %v229
    %v262 = vpack.c.b16 %v234, %v232
    %v263 = vpack.c.b16 %v235, %v233
    %v264 = vpack.c.b16 %v238, %v236
    %v265 = vpack.c.b16 %v239, %v237
    %v266 = vpack.c.b16 %v242, %v240
    %v267 = vpack.c.b16 %v243, %v241
    %v268 = vpack.c.b16 %v246, %v244
    %v269 = vpack.c.b16 %v247, %v245
    %v270 = vpack.c.b16 %v250, %v248
    %v271 = vpack.c.b16 %v251, %v249
    %v272 = vpack.c.b16 %v254, %v252
    %v273 = vpack.c.b16 %v255, %v253
    %v274 = vpack.c.b16 %v258, %v256
    %v275 = vpack.c.b16 %v259, %v257
    %292 = vmatprep.subr.bf16.mxu0 %v275
    %293 = vmatpush1.bf16.msra.mxu0 %v274
    %294 = vmatprep.subr.bf16.mxu0 %v273
    %295 = vmatpush1.bf16.msra.mxu0 %v272
    %296 = vmatprep.subr.bf16.mxu0 %v271
    %297 = vmatpush1.bf16.msra.mxu0 %v270
    %298 = vmatprep.subr.bf16.mxu0 %v269
    %299 = vmatpush1.bf16.msra.mxu0 %v268
    %300 = vmatprep.subr.bf16.mxu0 %v267
    %301 = vmatpush1.bf16.msra.mxu0 %v266
    %302 = vmatprep.subr.bf16.mxu0 %v265
    %303 = vmatpush1.bf16.msra.mxu0 %v264
    %304 = vmatprep.subr.bf16.mxu0 %v263
    %305 = vmatpush1.bf16.msra.mxu0 %v262
    %306 = vmatprep.subr.bf16.mxu0 %v261
    %307 = vmatpush1.bf16.msra.mxu0 %v260
    %308 = vmatprep.subr.bf16.mxu0 0
    %309 = vmatpush2.bf16.msra.mxu0 0
    %310 = vmatprep.subr.bf16.mxu0 0
    %311 = vmatpush2.bf16.msra.mxu0 0
    %312 = vmatprep.subr.bf16.mxu0 0
    %313 = vmatpush2.bf16.msra.mxu0 0
    %314 = vmatprep.subr.bf16.mxu0 0
    %315 = vmatpush2.bf16.msra.mxu0 0
    %316 = vmatprep.subr.bf16.mxu0 0
    %317 = vmatpush2.bf16.msra.mxu0 0
    %318 = vmatprep.subr.bf16.mxu0 0
    %319 = vmatpush2.bf16.msra.mxu0 0
    %320 = vmatprep.subr.bf16.mxu0 0
    %321 = vmatpush2.bf16.msra.mxu0 0
    %322 = vmatprep.subr.bf16.mxu0 0
    %323 = vmatpush2.bf16.msra.mxu0 0
    %324 = vmatprep.mubr.bf16.mxu0 0
    %325 = vmatmul.mubr.bf16.gmra.mxu0 %v210
    %v326 = vpop.f32.mrf.mxu0
    %v327 = vadd.f32 0.0, %v326
    %v328 = vpop.f32.mrf.mxu0
    %v329 = vadd.f32 0.0, %v328
    %v330 = vpop.f32.mrf.mxu0
    %v331 = vadd.f32 0.0, %v330
    %v332 = vpop.f32.mrf.mxu0
    %v333 = vadd.f32 0.0, %v332
    %334 = vdwg.mxu0
    %v335 = vpack.c.bf16 %v331, %v327
    %v336 = vpack.c.bf16 %v333, %v329
    %v339 = vunpack.c.l.b16 %v335
    %v340 = vunpack.c.l.b16 %v336
    %v341 = vunpack.c.h.b16 %v335
    %v342 = vunpack.c.h.b16 %v336
    %v343 = vpack.c.b16 %v340, %v339
    %v344 = vpack.c.b16 %v342, %v341
    %347 = vst [vmem:[#allocation4 + $0x8] sm:$0xff] %v343
    %348 = vst [vmem:[#allocation4 + $0x28] sm:$0xff] %v344
    %v349 = vld [vmem:[%s0 + $0x8] sm:$0xf]
    %v350 = vld [vmem:[%s0 + $0x18] sm:$0xf]
    %s351 = scalar_lea.vmem [#allocation2], 256
    %v352 = vld [vmem:[%s351] sm:$0xff]
    %v353 = vld [vmem:[%s351 + $0x8] sm:$0xff]
    %v354 = vld [vmem:[%s351 + $0x10] sm:$0xff]
    %v355 = vld [vmem:[%s351 + $0x18] sm:$0xff]
    %v356 = vld [vmem:[%s351 + $0x20] sm:$0xff]
    %v357 = vld [vmem:[%s351 + $0x28] sm:$0xff]
    %v358 = vld [vmem:[%s351 + $0x30] sm:$0xff]
    %v359 = vld [vmem:[%s351 + $0x38] sm:$0xff]
    %v360 = vld [vmem:[%s351 + $0x40] sm:$0xff]
    %v361 = vld [vmem:[%s351 + $0x48] sm:$0xff]
    %v362 = vld [vmem:[%s351 + $0x50] sm:$0xff]
    %v363 = vld [vmem:[%s351 + $0x58] sm:$0xff]
    %v364 = vld [vmem:[%s351 + $0x60] sm:$0xff]
    %v365 = vld [vmem:[%s351 + $0x68] sm:$0xff]
    %v366 = vld [vmem:[%s351 + $0x70] sm:$0xff]
    %v367 = vld [vmem:[%s351 + $0x78] sm:$0xff]
    %v370 = vunpack.c.l.b16 %v349
    %v371 = vunpack.c.l.b16 %v350
    %v372 = vpack.c.b16 %v371, %v370
    %v390 = vunpack.c.l.b16 %v352
    %v391 = vunpack.c.h.b16 %v352
    %v392 = vunpack.c.l.b16 %v353
    %v393 = vunpack.c.h.b16 %v353
    %v394 = vunpack.c.l.b16 %v354
    %v395 = vunpack.c.h.b16 %v354
    %v396 = vunpack.c.l.b16 %v355
    %v397 = vunpack.c.h.b16 %v355
    %v398 = vunpack.c.l.b16 %v356
    %v399 = vunpack.c.h.b16 %v356
    %v400 = vunpack.c.l.b16 %v357
    %v401 = vunpack.c.h.b16 %v357
    %v402 = vunpack.c.l.b16 %v358
    %v403 = vunpack.c.h.b16 %v358
    %v404 = vunpack.c.l.b16 %v359
    %v405 = vunpack.c.h.b16 %v359
    %v406 = vunpack.c.l.b16 %v360
    %v407 = vunpack.c.h.b16 %v360
    %v408 = vunpack.c.l.b16 %v361
    %v409 = vunpack.c.h.b16 %v361
    %v410 = vunpack.c.l.b16 %v362
    %v411 = vunpack.c.h.b16 %v362
    %v412 = vunpack.c.l.b16 %v363
    %v413 = vunpack.c.h.b16 %v363
    %v414 = vunpack.c.l.b16 %v364
    %v415 = vunpack.c.h.b16 %v364
    %v416 = vunpack.c.l.b16 %v365
    %v417 = vunpack.c.h.b16 %v365
    %v418 = vunpack.c.l.b16 %v366
    %v419 = vunpack.c.h.b16 %v366
    %v420 = vunpack.c.l.b16 %v367
    %v421 = vunpack.c.h.b16 %v367
    %v422 = vpack.c.b16 %v392, %v390
    %v423 = vpack.c.b16 %v393, %v391
    %v424 = vpack.c.b16 %v396, %v394
    %v425 = vpack.c.b16 %v397, %v395
    %v426 = vpack.c.b16 %v400, %v398
    %v427 = vpack.c.b16 %v401, %v399
    %v428 = vpack.c.b16 %v404, %v402
    %v429 = vpack.c.b16 %v405, %v403
    %v430 = vpack.c.b16 %v408, %v406
    %v431 = vpack.c.b16 %v409, %v407
    %v432 = vpack.c.b16 %v412, %v410
    %v433 = vpack.c.b16 %v413, %v411
    %v434 = vpack.c.b16 %v416, %v414
    %v435 = vpack.c.b16 %v417, %v415
    %v436 = vpack.c.b16 %v420, %v418
    %v437 = vpack.c.b16 %v421, %v419
    %454 = vmatprep.subr.bf16.mxu0 %v437
    %455 = vmatpush1.bf16.msra.mxu0 %v436
    %456 = vmatprep.subr.bf16.mxu0 %v435
    %457 = vmatpush1.bf16.msra.mxu0 %v434
    %458 = vmatprep.subr.bf16.mxu0 %v433
    %459 = vmatpush1.bf16.msra.mxu0 %v432
    %460 = vmatprep.subr.bf16.mxu0 %v431
    %461 = vmatpush1.bf16.msra.mxu0 %v430
    %462 = vmatprep.subr.bf16.mxu0 %v429
    %463 = vmatpush1.bf16.msra.mxu0 %v428
    %464 = vmatprep.subr.bf16.mxu0 %v427
    %465 = vmatpush1.bf16.msra.mxu0 %v426
    %466 = vmatprep.subr.bf16.mxu0 %v425
    %467 = vmatpush1.bf16.msra.mxu0 %v424
    %468 = vmatprep.subr.bf16.mxu0 %v423
    %469 = vmatpush1.bf16.msra.mxu0 %v422
    %470 = vmatprep.subr.bf16.mxu0 0
    %471 = vmatpush2.bf16.msra.mxu0 0
    %472 = vmatprep.subr.bf16.mxu0 0
    %473 = vmatpush2.bf16.msra.mxu0 0
    %474 = vmatprep.subr.bf16.mxu0 0
    %475 = vmatpush2.bf16.msra.mxu0 0
    %476 = vmatprep.subr.bf16.mxu0 0
    %477 = vmatpush2.bf16.msra.mxu0 0
    %478 = vmatprep.subr.bf16.mxu0 0
    %479 = vmatpush2.bf16.msra.mxu0 0
    %480 = vmatprep.subr.bf16.mxu0 0
    %481 = vmatpush2.bf16.msra.mxu0 0
    %482 = vmatprep.subr.bf16.mxu0 0
    %483 = vmatpush2.bf16.msra.mxu0 0
    %484 = vmatprep.subr.bf16.mxu0 0
    %485 = vmatpush2.bf16.msra.mxu0 0
    %486 = vmatprep.mubr.bf16.mxu0 0
    %487 = vmatmul.mubr.bf16.gmra.mxu0 %v372
    %v488 = vpop.f32.mrf.mxu0
    %v489 = vadd.f32 0.0, %v488
    %v490 = vpop.f32.mrf.mxu0
    %v491 = vadd.f32 0.0, %v490
    %v492 = vpop.f32.mrf.mxu0
    %v493 = vadd.f32 0.0, %v492
    %v494 = vpop.f32.mrf.mxu0
    %v495 = vadd.f32 0.0, %v494
    %496 = vdwg.mxu0
    %v497 = vpack.c.bf16 %v493, %v489
    %v498 = vpack.c.bf16 %v495, %v491
    %v501 = vunpack.c.l.b16 %v497
    %v502 = vunpack.c.l.b16 %v498
    %v503 = vunpack.c.h.b16 %v497
    %v504 = vunpack.c.h.b16 %v498
    %v505 = vpack.c.b16 %v502, %v501
    %v506 = vpack.c.b16 %v504, %v503
    %509 = vst [vmem:[#allocation4 + $0x10] sm:$0xff] %v505
    %510 = vst [vmem:[#allocation4 + $0x30] sm:$0xff] %v506
    %v511 = vld [vmem:[%s0 + $0xc] sm:$0xf]
    %v512 = vld [vmem:[%s0 + $0x1c] sm:$0xf]
    %s513 = scalar_lea.vmem [#allocation2], 384
    %v514 = vld [vmem:[%s513] sm:$0xff]
    %v515 = vld [vmem:[%s513 + $0x8] sm:$0xff]
    %v516 = vld [vmem:[%s513 + $0x10] sm:$0xff]
    %v517 = vld [vmem:[%s513 + $0x18] sm:$0xff]
    %v518 = vld [vmem:[%s513 + $0x20] sm:$0xff]
    %v519 = vld [vmem:[%s513 + $0x28] sm:$0xff]
    %v520 = vld [vmem:[%s513 + $0x30] sm:$0xff]
    %v521 = vld [vmem:[%s513 + $0x38] sm:$0xff]
    %v522 = vld [vmem:[%s513 + $0x40] sm:$0xff]
    %v523 = vld [vmem:[%s513 + $0x48] sm:$0xff]
    %v524 = vld [vmem:[%s513 + $0x50] sm:$0xff]
    %v525 = vld [vmem:[%s513 + $0x58] sm:$0xff]
    %v526 = vld [vmem:[%s513 + $0x60] sm:$0xff]
    %v527 = vld [vmem:[%s513 + $0x68] sm:$0xff]
    %v528 = vld [vmem:[%s513 + $0x70] sm:$0xff]
    %v529 = vld [vmem:[%s513 + $0x78] sm:$0xff]
    %v532 = vunpack.c.l.b16 %v511
    %v533 = vunpack.c.l.b16 %v512
    %v534 = vpack.c.b16 %v533, %v532
    %v552 = vunpack.c.l.b16 %v514
    %v553 = vunpack.c.h.b16 %v514
    %v554 = vunpack.c.l.b16 %v515
    %v555 = vunpack.c.h.b16 %v515
    %v556 = vunpack.c.l.b16 %v516
    %v557 = vunpack.c.h.b16 %v516
    %v558 = vunpack.c.l.b16 %v517
    %v559 = vunpack.c.h.b16 %v517
    %v560 = vunpack.c.l.b16 %v518
    %v561 = vunpack.c.h.b16 %v518
    %v562 = vunpack.c.l.b16 %v519
    %v563 = vunpack.c.h.b16 %v519
    %v564 = vunpack.c.l.b16 %v520
    %v565 = vunpack.c.h.b16 %v520
    %v566 = vunpack.c.l.b16 %v521
    %v567 = vunpack.c.h.b16 %v521
    %v568 = vunpack.c.l.b16 %v522
    %v569 = vunpack.c.h.b16 %v522
    %v570 = vunpack.c.l.b16 %v523
    %v571 = vunpack.c.h.b16 %v523
    %v572 = vunpack.c.l.b16 %v524
    %v573 = vunpack.c.h.b16 %v524
    %v574 = vunpack.c.l.b16 %v525
    %v575 = vunpack.c.h.b16 %v525
    %v576 = vunpack.c.l.b16 %v526
    %v577 = vunpack.c.h.b16 %v526
    %v578 = vunpack.c.l.b16 %v527
    %v579 = vunpack.c.h.b16 %v527
    %v580 = vunpack.c.l.b16 %v528
    %v581 = vunpack.c.h.b16 %v528
    %v582 = vunpack.c.l.b16 %v529
    %v583 = vunpack.c.h.b16 %v529
    %v584 = vpack.c.b16 %v554, %v552
    %v585 = vpack.c.b16 %v555, %v553
    %v586 = vpack.c.b16 %v558, %v556
    %v587 = vpack.c.b16 %v559, %v557
    %v588 = vpack.c.b16 %v562, %v560
    %v589 = vpack.c.b16 %v563, %v561
    %v590 = vpack.c.b16 %v566, %v564
    %v591 = vpack.c.b16 %v567, %v565
    %v592 = vpack.c.b16 %v570, %v568
    %v593 = vpack.c.b16 %v571, %v569
    %v594 = vpack.c.b16 %v574, %v572
    %v595 = vpack.c.b16 %v575, %v573
    %v596 = vpack.c.b16 %v578, %v576
    %v597 = vpack.c.b16 %v579, %v577
    %v598 = vpack.c.b16 %v582, %v580
    %v599 = vpack.c.b16 %v583, %v581
    %616 = vmatprep.subr.bf16.mxu0 %v599
    %617 = vmatpush1.bf16.msra.mxu0 %v598
    %618 = vmatprep.subr.bf16.mxu0 %v597
    %619 = vmatpush1.bf16.msra.mxu0 %v596
    %620 = vmatprep.subr.bf16.mxu0 %v595
    %621 = vmatpush1.bf16.msra.mxu0 %v594
    %622 = vmatprep.subr.bf16.mxu0 %v593
    %623 = vmatpush1.bf16.msra.mxu0 %v592
    %624 = vmatprep.subr.bf16.mxu0 %v591
    %625 = vmatpush1.bf16.msra.mxu0 %v590
    %626 = vmatprep.subr.bf16.mxu0 %v589
    %627 = vmatpush1.bf16.msra.mxu0 %v588
    %628 = vmatprep.subr.bf16.mxu0 %v587
    %629 = vmatpush1.bf16.msra.mxu0 %v586
    %630 = vmatprep.subr.bf16.mxu0 %v585
    %631 = vmatpush1.bf16.msra.mxu0 %v584
    %632 = vmatprep.subr.bf16.mxu0 0
    %633 = vmatpush2.bf16.msra.mxu0 0
    %634 = vmatprep.subr.bf16.mxu0 0
    %635 = vmatpush2.bf16.msra.mxu0 0
    %636 = vmatprep.subr.bf16.mxu0 0
    %637 = vmatpush2.bf16.msra.mxu0 0
    %638 = vmatprep.subr.bf16.mxu0 0
    %639 = vmatpush2.bf16.msra.mxu0 0
    %640 = vmatprep.subr.bf16.mxu0 0
    %641 = vmatpush2.bf16.msra.mxu0 0
    %642 = vmatprep.subr.bf16.mxu0 0
    %643 = vmatpush2.bf16.msra.mxu0 0
    %644 = vmatprep.subr.bf16.mxu0 0
    %645 = vmatpush2.bf16.msra.mxu0 0
    %646 = vmatprep.subr.bf16.mxu0 0
    %647 = vmatpush2.bf16.msra.mxu0 0
    %648 = vmatprep.mubr.bf16.mxu0 0
    %649 = vmatmul.mubr.bf16.gmra.mxu0 %v534
    %v650 = vpop.f32.mrf.mxu0
    %v651 = vadd.f32 0.0, %v650
    %v652 = vpop.f32.mrf.mxu0
    %v653 = vadd.f32 0.0, %v652
    %v654 = vpop.f32.mrf.mxu0
    %v655 = vadd.f32 0.0, %v654
    %v656 = vpop.f32.mrf.mxu0
    %v657 = vadd.f32 0.0, %v656
    %658 = vdwg.mxu0
    %v659 = vpack.c.bf16 %v655, %v651
    %v660 = vpack.c.bf16 %v657, %v653
    %v663 = vunpack.c.l.b16 %v659
    %v664 = vunpack.c.l.b16 %v660
    %v665 = vunpack.c.h.b16 %v659
    %v666 = vunpack.c.h.b16 %v660
    %v667 = vpack.c.b16 %v664, %v663
    %v668 = vpack.c.b16 %v666, %v665
    %671 = vst [vmem:[#allocation4 + $0x18] sm:$0xff] %v667
    %672 = vst [vmem:[#allocation4 + $0x38] sm:$0xff] %v668
    // Predicated region
    $region14: #{deepseek_v2_bmm.1} parent=1 // pred_check
      _
    $region15: #{deepseek_v2_bmm.1} parent=1 // pred_check_branch
      %674 = sbr.rel (0) target = $region17
    $region16: #{deepseek_v2_bmm.1} parent=1 // pred_region
      // Predicated region
      $region18: #{deepseek_v2_bmm.1} parent=16 // pred_check
        _
      $region19: #{deepseek_v2_bmm.1} parent=16 // pred_check_branch
        %676 = sbr.rel (0) target = $region21
      $region20: #{deepseek_v2_bmm.1} parent=16 // pred_region
        // Predicated region
        $region22: #{deepseek_v2_bmm.1} parent=20 // pred_check
          _
        $region23: #{deepseek_v2_bmm.1} parent=20 // pred_check_branch
          %678 = sbr.rel (0) target = $region25
        $region24: #{deepseek_v2_bmm.1} parent=20 // pred_region
          loop: start=0, step=1, limit=1
          $region26: #{deepseek_v2_bmm.1} parent=24 // loop_pre_header
            _
          $region27: #{deepseek_v2_bmm.1} parent=24 // loop_header
            %s680 = sphi 0, %s684
            %p681 = scmp.ge.s32.totalorder %s680, 1
            %s685 = sphi [#allocation4], [#allocation4]
            %s686 = sphi %s2, %s2
          $region28: #{deepseek_v2_bmm.1} parent=24 // loop_header_branch
            %683 = sbr.rel (%p681) target = $region32
          $region29: #{deepseek_v2_bmm.1} parent=24 // loop_body
            %v687 = vld [vmem:[%s685] sm:$0xff]
            %688 = vst [vmem:[%s686] sm:$0xff] %v687
            %v689 = vld [vmem:[%s685 + $0x8] sm:$0xff]
            %690 = vst [vmem:[%s686 + $0x8] sm:$0xff] %v689
            %v691 = vld [vmem:[%s685 + $0x10] sm:$0xff]
            %692 = vst [vmem:[%s686 + $0x10] sm:$0xff] %v691
            %v693 = vld [vmem:[%s685 + $0x18] sm:$0xff]
            %694 = vst [vmem:[%s686 + $0x18] sm:$0xff] %v693
          $region30: #{deepseek_v2_bmm.1} parent=24 // loop_footer
            %s684 = sadd.s32 1, %s680
          $region31: #{deepseek_v2_bmm.1} parent=24 // loop_footer_branch
            %679 = sbr.rel target = $region27
          $region32: #{deepseek_v2_bmm.1} parent=24 // loop_exit
            _
        $region25: #{deepseek_v2_bmm.1} parent=20 // pred_fallthru
          _
        // Predicated region
        $region33: #{deepseek_v2_bmm.1} parent=20 // pred_check
          _
        $region34: #{deepseek_v2_bmm.1} parent=20 // pred_check_branch
          %696 = sbr.rel target = $region36
        $region35: #{deepseek_v2_bmm.1} parent=20 // pred_region
          _
        $region36: #{deepseek_v2_bmm.1} parent=20 // pred_fallthru
          _
      $region21: #{deepseek_v2_bmm.1} parent=16 // pred_fallthru
        _
      %697 = vnop
    $region17: #{deepseek_v2_bmm.1} parent=1 // pred_fallthru
      _
    // Predicated region
    $region37: #{deepseek_v2_bmm.1} parent=1 // pred_check
      _
    $region38: #{deepseek_v2_bmm.1} parent=1 // pred_check_branch
      %699 = sbr.rel (0) target = $region40
    $region39: #{deepseek_v2_bmm.1} parent=1 // pred_region
      _
    $region40: #{deepseek_v2_bmm.1} parent=1 // pred_fallthru
      _
    %700 = vsyncpa [#allocation3], 1

</llo_original>
